<compile_context>
chip_gen: v5e
topology: v5e:2x2
jax: 0.10.0
libtpu: 0.0.40
codegen_flags: <defaults>
</compile_context>

<pallas_src>
import jax
import jax.numpy as jnp
from jax.experimental import pallas as pl
from jax.experimental.pallas import tpu as pltpu

_LANE = 128  # lane-density padding for feature dims / row tiles


def _round_up(x, m):
    return ((x + m - 1) // m) * m


def _select_row_tile(n):
    """Pick (tm, n_pad).

    n_pad is n rounded up to 128 only (no blow-up of small graphs).  tm is the
    largest multiple of 128 that divides n_pad while keeping the double-buffered
    bf16 A_hat row slab (2 * tm * n_pad * 2B) under ~24 MiB; when possible keep
    >= 2 row tiles so the "parallel" axis feeds both v7x TensorCores.
    """
    n_pad = _round_up(max(int(n), 1), _LANE)
    budget = 24 * 1024 * 1024
    tm = _LANE
    for cand in (512, 384, 256, 128):
        if cand <= n_pad and n_pad % cand == 0 and 2 * cand * n_pad * 2 <= budget:
            tm = cand
            break
    # v7x megacore: prefer at least two row tiles when the graph allows it.
    if n_pad // tm < 2 and n_pad // 2 >= _LANE and (n_pad // 2) % _LANE == 0:
        tm = n_pad // 2
    return tm, n_pad


def _vmem_limit_bytes(tm, n_pad, f_dim_pad):
    a_slab = 2 * tm * n_pad * 2            # A_hat row slab, bf16, double-buffered
    xw_res = 2 * n_pad * f_dim_pad * 2     # resident XW, bf16 (allow 2 buffers)
    outs = 2 * tm * f_dim_pad * 4          # output tiles, f32, double-buffered
    misc = 2 * 1024 * 1024
    need = int(1.25 * (a_slab + xw_res + outs + misc))
    return max(32 * 1024 * 1024, min(need, 48 * 1024 * 1024))


# ---- kernel 1: fused  XW2 = ReLU(A_hat @ XW1 + b1) @ W2  (row-slab grid) ---- #
def _gcn_layer1_fused_kernel(a_ref, xw1_ref, b1_ref, w2_ref, o_ref):
    # a_ref: (tm, n_pad) bf16, xw1_ref: (n_pad, f_hid) bf16 (resident)
    h = jnp.dot(a_ref[...], xw1_ref[...], preferred_element_type=jnp.float32)
    h = jnp.maximum(h + b1_ref[...], 0.0)
    # TODO(synk): F.dropout(p=0.5, training=self.training) modeled as eval-mode
    # identity; training parity would need pltpu.prng_random_bits masking here.
    o_ref[...] = jnp.dot(h.astype(w2_ref.dtype), w2_ref[...],
                         preferred_element_type=jnp.float32).astype(o_ref.dtype)


def _layer1_fused(a_hat, xw1, b1, w2, *, tm, vmem_limit):
    n_pad = a_hat.shape[0]
    f_hid = xw1.shape[1]
    f_out = w2.shape[1]
    return pl.pallas_call(
        _gcn_layer1_fused_kernel,
        out_shape=jax.ShapeDtypeStruct((n_pad, f_out), jnp.bfloat16),
        grid_spec=pltpu.PrefetchScalarGridSpec(
            num_scalar_prefetch=0,
            grid=(n_pad // tm,),
            in_specs=[
                pl.BlockSpec((tm, n_pad), lambda i: (i, 0)),      # A_hat row slab
                pl.BlockSpec((n_pad, f_hid), lambda i: (0, 0)),   # XW1 (resident)
                pl.BlockSpec((1, f_hid), lambda i: (0, 0)),       # b1 (resident)
                pl.BlockSpec((f_hid, f_out), lambda i: (0, 0)),   # W2 (resident)
            ],
            out_specs=pl.BlockSpec((tm, f_out), lambda i: (i, 0)),
        ),
        compiler_params=pltpu.CompilerParams(
            dimension_semantics=("parallel",),
            vmem_limit_bytes=vmem_limit),
    )(a_hat, xw1, b1, w2)


# ---------- kernel 2: out = A_hat @ XW2 + b2  (row-slab grid, f32 out) ------ #
def _gcn_layer2_kernel(a_ref, xw2_ref, b2_ref, o_ref):
    out = jnp.dot(a_ref[...], xw2_ref[...], preferred_element_type=jnp.float32)
    o_ref[...] = (out + b2_ref[...]).astype(o_ref.dtype)


def _layer2_aggregate(a_hat, xw2, b2, *, tm, vmem_limit):
    n_pad = a_hat.shape[0]
    f_out = xw2.shape[1]
    return pl.pallas_call(
        _gcn_layer2_kernel,
        out_shape=jax.ShapeDtypeStruct((n_pad, f_out), jnp.float32),
        grid_spec=pltpu.PrefetchScalarGridSpec(
            num_scalar_prefetch=0,
            grid=(n_pad // tm,),
            in_specs=[
                pl.BlockSpec((tm, n_pad), lambda i: (i, 0)),      # A_hat row slab
                pl.BlockSpec((n_pad, f_out), lambda i: (0, 0)),   # XW2 (resident)
                pl.BlockSpec((1, f_out), lambda i: (0, 0)),       # b2 (resident)
            ],
            out_specs=pl.BlockSpec((tm, f_out), lambda i: (i, 0)),
        ),
        compiler_params=pltpu.CompilerParams(
            dimension_semantics=("parallel",),
            vmem_limit_bytes=vmem_limit),
    )(a_hat, xw2, b2)


# ------------------------------ JAX glue ----------------------------------- #
def gcn_norm_dense(edge_index, edge_weight, num_nodes):
    """PyG gcn_norm with add_self_loops=True, as a dense [N, N] matrix such that
    out[i] = sum_j A_hat[i, j] * x'[j]  (messages aggregated at the target)."""
    row, col = edge_index[0], edge_index[1]
    if edge_weight is None:
        edge_weight = jnp.ones(row.shape[0], dtype=jnp.float32)
    loop = jnp.arange(num_nodes, dtype=edge_index.dtype)
    row = jnp.concatenate([row, loop])
    col = jnp.concatenate([col, loop])
    ew = jnp.concatenate([edge_weight.astype(jnp.float32),
                          jnp.ones(num_nodes, jnp.float32)])
    deg = jnp.zeros((num_nodes,), jnp.float32).at[col].add(ew)
    dinv = jnp.where(deg > 0, jax.lax.rsqrt(deg), 0.0)
    norm = dinv[row] * ew * dinv[col]
    a_hat = jnp.zeros((num_nodes, num_nodes), jnp.float32).at[col, row].add(norm)
    return a_hat


def gcn_forward(params, x, edge_index, edge_weight=None, *, use_edge_weight=True):
    ew = edge_weight.reshape(-1) if use_edge_weight else None
    n = x.shape[0]
    f_hid = params["w1"].shape[1]
    f_out = params["w2"].shape[1]

    tm, n_pad = _select_row_tile(n)
    f_hid_pad = _round_up(f_hid, _LANE)
    f_out_pad = _round_up(f_out, _LANE)
    vmem_limit = _vmem_limit_bytes(tm, n_pad, max(f_hid_pad, f_out_pad))

    # Dense normalized adjacency, zero-padded to the row-tile multiple, bf16.
    a_hat = gcn_norm_dense(edge_index, ew, n)
    a_hat = jnp.pad(a_hat, ((0, n_pad - n), (0, n_pad - n))).astype(jnp.bfloat16)

    # Layer-1 feature transform (K = gnn_indim, tiny): plain XLA, not a kernel.
    x_pad = jnp.pad(x.astype(jnp.float32), ((0, n_pad - n), (0, 0)))
    w1 = jnp.pad(params["w1"], ((0, 0), (0, f_hid_pad - f_hid)))
    xw1 = (x_pad @ w1).astype(jnp.bfloat16)                       # [n_pad, f_hid_pad]

    b1 = jnp.pad(params["b1"], ((0, 0), (0, f_hid_pad - f_hid)))  # f32
    w2 = jnp.pad(params["w2"],
                 ((0, f_hid_pad - f_hid), (0, f_out_pad - f_out))).astype(jnp.bfloat16)
    b2 = jnp.pad(params["b2"], ((0, 0), (0, f_out_pad - f_out)))  # f32

    # Pass 1: XW2 = ReLU(A_hat @ XW1 + b1) @ W2   (conv1 + ReLU + conv2.lin fused)
    xw2 = _layer1_fused(a_hat, xw1, b1, w2, tm=tm, vmem_limit=vmem_limit)
    # Pass 2: out = A_hat @ XW2 + b2              (conv2 aggregation)
    out = _layer2_aggregate(a_hat, xw2, b2, tm=tm, vmem_limit=vmem_limit)
    return out[:n, :f_out]


def init_params(key, gnn_indim, gcn_nhid, gnn_outdim):
    k1, k2 = jax.random.split(key)

    def glorot(k, fan_in, fan_out):
        lim = (6.0 / (fan_in + fan_out)) ** 0.5
        return jax.random.uniform(k, (fan_in, fan_out), jnp.float32, -lim, lim)

    return {
        "w1": glorot(k1, gnn_indim, gcn_nhid),
        "b1": jnp.zeros((1, gcn_nhid), jnp.float32),
        "w2": glorot(k2, gcn_nhid, gnn_outdim),
        "b2": jnp.zeros((1, gnn_outdim), jnp.float32),
    }


def _gcn_reference(params, x, edge_index, edge_weight, use_edge_weight):
    """Pure-JAX f32 reference for numerical validation."""
    ew = edge_weight.reshape(-1) if use_edge_weight else None
    a_hat = gcn_norm_dense(edge_index, ew, x.shape[0])
    h = jnp.maximum(a_hat @ (x @ params["w1"]) + params["b1"], 0.0)
    return a_hat @ (h @ params["w2"]) + params["b2"]


if __name__ == "__main__":
    # Small config consistent with the module's __init__.
    config = {"gnn_indim": 8, "gcn_nhid": 32, "gnn_outdim": 8, "edge_weight": True}
    N, E = 16, 48

    key = jax.random.PRNGKey(0)
    kx, ke, kw, kp = jax.random.split(key, 4)

    x = jax.random.normal(kx, (N, config["gnn_indim"]), jnp.float32)
    edge_index = jax.random.randint(ke, (2, E), 0, N, dtype=jnp.int32)
    edge_weight = jax.random.uniform(kw, (E, 1), jnp.float32, 0.1, 1.0)

    params = init_params(kp, config["gnn_indim"], config["gcn_nhid"],
                         config["gnn_outdim"])

    out = gcn_forward(params, x, edge_index, edge_weight,
                      use_edge_weight=config["edge_weight"])
    out = jax.block_until_ready(out)

    assert out.shape == (N, config["gnn_outdim"]) and out.dtype == jnp.float32

    ref = _gcn_reference(params, x, edge_index, edge_weight,
                         use_edge_weight=config["edge_weight"])
    ref = jax.block_until_ready(ref)
    # bf16 A_hat / XW1 / h / W2 / XW2 streams, f32 MXU accumulation -> loose tol.
    assert jnp.allclose(out, ref, atol=5e-2, rtol=5e-2), "mismatch vs f32 reference"

    print("KERNEL_OK")
</pallas_src>

<mosaic_0001>
module attributes {stable_mosaic.version = 11 : i64} {
  func.func @_gcn_layer1_fused_kernel(%arg0: i32, %arg1: memref<128x128xbf16, #tpu.memory_space<vmem>>, %arg2: memref<128x128xbf16, #tpu.memory_space<vmem>>, %arg3: memref<1x128xf32, #tpu.memory_space<vmem>>, %arg4: memref<128x128xbf16, #tpu.memory_space<vmem>>, %arg5: memref<128x128xbf16, #tpu.memory_space<vmem>>) attributes {dimension_semantics = [#tpu.dimension_semantics<parallel>], iteration_bounds = array<i64: 1>, scalar_prefetch = 0 : i64, scratch_operands = 0 : i64, tpu.core_type = #tpu.core_type<tc>, window_params = [{transform_indices = @transform_0, window_bounds = array<i64: 128, 128>}, {pipeline_mode = #tpu.pipeline_mode<synchronous>, transform_indices = @transform_1, window_bounds = array<i64: 128, 128>}, {pipeline_mode = #tpu.pipeline_mode<synchronous>, transform_indices = @transform_2, window_bounds = array<i64: 1, 128>}, {pipeline_mode = #tpu.pipeline_mode<synchronous>, transform_indices = @transform_3, window_bounds = array<i64: 128, 128>}, {transform_indices = @transform_4, window_bounds = array<i64: 128, 128>}]} {
    %c0 = arith.constant 0 : index
    %c0_0 = arith.constant 0 : index
    %0 = vector.load %arg1[%c0, %c0_0] : memref<128x128xbf16, #tpu.memory_space<vmem>>, vector<128x128xbf16>
    %c0_1 = arith.constant 0 : index
    %c0_2 = arith.constant 0 : index
    %1 = vector.load %arg2[%c0_1, %c0_2] : memref<128x128xbf16, #tpu.memory_space<vmem>>, vector<128x128xbf16>
    %cst = arith.constant dense<0.000000e+00> : vector<128x128xf32>
    %2 = tpu.matmul %0, %1, %cst {dimension_numbers = #tpu.dot_dimension_numbers<[1], [0], [0], [1], [0, 0, 1, 1], [], []>} : vector<128x128xbf16>, vector<128x128xbf16>, vector<128x128xf32> -> vector<128x128xf32>
    %c0_3 = arith.constant 0 : index
    %c0_4 = arith.constant 0 : index
    %3 = vector.load %arg3[%c0_3, %c0_4] : memref<1x128xf32, #tpu.memory_space<vmem>>, vector<1x128xf32>
    %4 = vector.broadcast %3 : vector<1x128xf32> to vector<128x128xf32>
    %5 = arith.addf %2, %4 : vector<128x128xf32>
    %cst_5 = arith.constant 0.000000e+00 : f32
    %6 = vector.broadcast %cst_5 : f32 to vector<128x128xf32>
    %7 = arith.maximumf %5, %6 : vector<128x128xf32>
    %8 = arith.truncf %7 : vector<128x128xf32> to vector<128x128xbf16>
    %c0_6 = arith.constant 0 : index
    %c0_7 = arith.constant 0 : index
    %9 = vector.load %arg4[%c0_6, %c0_7] : memref<128x128xbf16, #tpu.memory_space<vmem>>, vector<128x128xbf16>
    %cst_8 = arith.constant dense<0.000000e+00> : vector<128x128xf32>
    %10 = tpu.matmul %8, %9, %cst_8 {dimension_numbers = #tpu.dot_dimension_numbers<[1], [0], [0], [1], [0, 0, 1, 1], [], []>} : vector<128x128xbf16>, vector<128x128xbf16>, vector<128x128xf32> -> vector<128x128xf32>
    %11 = arith.truncf %10 : vector<128x128xf32> to vector<128x128xbf16>
    %c0_9 = arith.constant 0 : index
    %c0_10 = arith.constant 0 : index
    %12 = vector.load %arg5[%c0_9, %c0_10] : memref<128x128xbf16, #tpu.memory_space<vmem>>, vector<128x128xbf16>
    tpu.vector_store %arg5[%c0_9, %c0_10], %11 {strides = array<i32>} : memref<128x128xbf16, #tpu.memory_space<vmem>>, vector<128x128xbf16>,
    return
  }
  func.func @transform_0(%arg0: i32) -> (i32, i32) {
    %c0_i32 = arith.constant 0 : i32
    %c0_i32_0 = arith.constant 0 : i32
    return %arg0, %c0_i32 : i32, i32
  }
  func.func @transform_1(%arg0: i32) -> (i32, i32) {
    %c0_i32 = arith.constant 0 : i32
    %c0_i32_0 = arith.constant 0 : i32
    %c0_i32_1 = arith.constant 0 : i32
    return %c0_i32, %c0_i32_0 : i32, i32
  }
  func.func @transform_2(%arg0: i32) -> (i32, i32) {
    %c0_i32 = arith.constant 0 : i32
    %c0_i32_0 = arith.constant 0 : i32
    %c0_i32_1 = arith.constant 0 : i32
    return %c0_i32, %c0_i32_0 : i32, i32
  }
  func.func @transform_3(%arg0: i32) -> (i32, i32) {
    %c0_i32 = arith.constant 0 : i32
    %c0_i32_0 = arith.constant 0 : i32
    %c0_i32_1 = arith.constant 0 : i32
    return %c0_i32, %c0_i32_0 : i32, i32
  }
  func.func @transform_4(%arg0: i32) -> (i32, i32) {
    %c0_i32 = arith.constant 0 : i32
    %c0_i32_0 = arith.constant 0 : i32
    return %arg0, %c0_i32 : i32, i32
  }
}

</mosaic_0001>

<llo_original>
// kernel: tpu_custom_call.1
$region0: #{tpu_custom_call.1}
  #allocation0 [shape = 'u32[]', space=smem, size = 0x4, offset = 0x4, fixed_abs, tag = 'smem constant byte address 0x4 - core index']
  #allocation1 [shape = 'u32[72,128]{1,0:T(1,128)}', space=vmem, size = 0x9000, scoped, tag = 'internal scratch']
  %s0 = inlined_call_operand.hbm [shape: bf16[128,128], index: 0, kind: input, shape index: {}]
  %s1 = inlined_call_operand.hbm [shape: bf16[128,128], index: 1, kind: input, shape index: {}]
  %s2 = inlined_call_operand.vmem [shape: f32[1,128], index: 2, kind: input, shape index: {}]
  %s3 = inlined_call_operand.hbm [shape: bf16[128,128], index: 3, kind: input, shape index: {}]
  %s4 = inlined_call_operand.hbm [shape: bf16[128,128], index: 4, kind: output, shape index: {}]
  %s5 = sld [smem:[#allocation0]]
  $region38: #{tpu_custom_call.1} parent=0
    _
  %s7 = ssub.s32 1, %s5
  %s8 = scalar_select 0, %s7, %s5
  $region1: #{tpu_custom_call.1} parent=0
    #allocation2 [shape = 'u8[32768]{0}', space=vmem, size = 0x8000, scoped, tag = 'input window, operand 0, single buffered']
    #allocation3 [shape = 's32[1]{0}', space=sflag, size = 0x4, scoped, tag = 'scoped memory for tpu_custom_call.1']
    #allocation4 [shape = 's32[1]{0}', space=sflag, size = 0x4, scoped, tag = 'scoped memory for tpu_custom_call.1']
    #allocation5 [shape = 'u8[32768]{0}', space=vmem, size = 0x8000, scoped, tag = 'input window, operand 1, single buffered']
    #allocation6 [shape = 's32[1]{0}', space=sflag, size = 0x4, scoped, tag = 'scoped memory for tpu_custom_call.1']
    #allocation7 [shape = 'u8[32768]{0}', space=vmem, size = 0x8000, scoped, tag = 'input window, operand 3, single buffered']
    #allocation8 [shape = 'u8[32768]{0}', space=vmem, size = 0x8000, scoped, tag = 'output window, operand 0, single buffered']
    %9 = vsyncpa [#allocation3], 0
    %10 = vsyncpa [#allocation6], 0
    %11 = vsyncpa [#allocation4], 0
    // Predicated region
    $region2: #{tpu_custom_call.1} parent=1 // pred_check
      _
    $region3: #{tpu_custom_call.1} parent=1 // pred_check_branch
      %13 = sbr.rel (0) target = $region5
    $region4: #{tpu_custom_call.1} parent=1 // pred_region
      %15 = vsyncadd [#allocation3], 0
      %s16 = sshll.u32 %s0, 4
      %s17 = int_to_ptr.hbm [resolvable:$true] %s16
      %s18 = sshll.u32 [#allocation2], 4
      %s19 = int_to_ptr.vmem [resolvable:$true] %s18
      %24 = dma.hbm_to_vmem [thread:$0]  %s17, 1024, %s19, [#allocation3], 64, 64, 4
    $region5: #{tpu_custom_call.1} parent=1 // pred_fallthru
      _
    // Predicated region
    $region6: #{tpu_custom_call.1} parent=1 // pred_check
      _
    $region7: #{tpu_custom_call.1} parent=1 // pred_check_branch
      %26 = sbr.rel (0) target = $region9
    $region8: #{tpu_custom_call.1} parent=1 // pred_region
      %28 = vsyncadd [#allocation6], 0
      %s29 = sshll.u32 %s1, 4
      %s30 = int_to_ptr.hbm [resolvable:$true] %s29
      %s31 = sshll.u32 [#allocation5], 4
      %s32 = int_to_ptr.vmem [resolvable:$true] %s31
      %37 = dma.hbm_to_vmem [thread:$0]  %s30, 1024, %s32, [#allocation6], 64, 64, 4
    $region9: #{tpu_custom_call.1} parent=1 // pred_fallthru
      _
    // Predicated region
    $region10: #{tpu_custom_call.1} parent=1 // pred_check
      _
    $region11: #{tpu_custom_call.1} parent=1 // pred_check_branch
      %39 = sbr.rel (0) target = $region13
    $region12: #{tpu_custom_call.1} parent=1 // pred_region
      _
    $region13: #{tpu_custom_call.1} parent=1 // pred_fallthru
      _
    // Predicated region
    $region14: #{tpu_custom_call.1} parent=1 // pred_check
      _
    $region15: #{tpu_custom_call.1} parent=1 // pred_check_branch
      %41 = sbr.rel (0) target = $region17
    $region16: #{tpu_custom_call.1} parent=1 // pred_region
      %43 = vsyncadd [#allocation6], 0
      %s44 = sshll.u32 %s3, 4
      %s45 = int_to_ptr.hbm [resolvable:$true] %s44
      %s46 = sshll.u32 [#allocation7], 4
      %s47 = int_to_ptr.vmem [resolvable:$true] %s46
      %52 = dma.hbm_to_vmem [thread:$0]  %s45, 1024, %s47, [#allocation6], 64, 64, 4
    $region17: #{tpu_custom_call.1} parent=1 // pred_fallthru
      _
    // Predicated region
    $region18: #{tpu_custom_call.1} parent=1 // pred_check
      _
    $region19: #{tpu_custom_call.1} parent=1 // pred_check_branch
      %54 = sbr.rel (0) target = $region21
    $region20: #{tpu_custom_call.1} parent=1 // pred_region
      %56 = dma.done [#allocation3], 1024
    $region21: #{tpu_custom_call.1} parent=1 // pred_fallthru
      _
    // Predicated region
    $region22: #{tpu_custom_call.1} parent=1 // pred_check
      _
    $region23: #{tpu_custom_call.1} parent=1 // pred_check_branch
      %58 = sbr.rel (0) target = $region25
    $region24: #{tpu_custom_call.1} parent=1 // pred_region
      %60 = dma.done [#allocation6], 1024
    $region25: #{tpu_custom_call.1} parent=1 // pred_fallthru
      _
    // Predicated region
    $region26: #{tpu_custom_call.1} parent=1 // pred_check
      _
    $region27: #{tpu_custom_call.1} parent=1 // pred_check_branch
      %62 = sbr.rel (0) target = $region29
    $region28: #{tpu_custom_call.1} parent=1 // pred_region
      %64 = dma.done [#allocation6], 1024
    $region29: #{tpu_custom_call.1} parent=1 // pred_fallthru
      _
    %v65 = vld [vmem:[#allocation2] sm:$0xf]
    %v66 = vld [vmem:[#allocation2 + $0x4] sm:$0xf]
    %v67 = vld [vmem:[#allocation2 + $0x8] sm:$0xf]
    %v68 = vld [vmem:[#allocation2 + $0xc] sm:$0xf]
    %v69 = vld [vmem:[#allocation2 + $0x10] sm:$0xf]
    %v70 = vld [vmem:[#allocation2 + $0x14] sm:$0xf]
    %v71 = vld [vmem:[#allocation2 + $0x18] sm:$0xf]
    %v72 = vld [vmem:[#allocation2 + $0x1c] sm:$0xf]
    %v73 = vld [vmem:[#allocation2 + $0x20] sm:$0xf]
    %v74 = vld [vmem:[#allocation2 + $0x24] sm:$0xf]
    %v75 = vld [vmem:[#allocation2 + $0x28] sm:$0xf]
    %v76 = vld [vmem:[#allocation2 + $0x2c] sm:$0xf]
    %v77 = vld [vmem:[#allocation2 + $0x30] sm:$0xf]
    %v78 = vld [vmem:[#allocation2 + $0x34] sm:$0xf]
    %v79 = vld [vmem:[#allocation2 + $0x38] sm:$0xf]
    %v80 = vld [vmem:[#allocation2 + $0x3c] sm:$0xf]
    %v81 = vld [vmem:[#allocation5] sm:$0xf]
    %v82 = vld [vmem:[#allocation5 + $0x4] sm:$0xf]
    %v83 = vld [vmem:[#allocation5 + $0x8] sm:$0xf]
    %v84 = vld [vmem:[#allocation5 + $0xc] sm:$0xf]
    %v85 = vld [vmem:[#allocation5 + $0x10] sm:$0xf]
    %v86 = vld [vmem:[#allocation5 + $0x14] sm:$0xf]
    %v87 = vld [vmem:[#allocation5 + $0x18] sm:$0xf]
    %v88 = vld [vmem:[#allocation5 + $0x1c] sm:$0xf]
    %v89 = vld [vmem:[#allocation5 + $0x20] sm:$0xf]
    %v90 = vld [vmem:[#allocation5 + $0x24] sm:$0xf]
    %v91 = vld [vmem:[#allocation5 + $0x28] sm:$0xf]
    %v92 = vld [vmem:[#allocation5 + $0x2c] sm:$0xf]
    %v93 = vld [vmem:[#allocation5 + $0x30] sm:$0xf]
    %v94 = vld [vmem:[#allocation5 + $0x34] sm:$0xf]
    %v95 = vld [vmem:[#allocation5 + $0x38] sm:$0xf]
    %v96 = vld [vmem:[#allocation5 + $0x3c] sm:$0xf]
    %v97 = vld [vmem:[%s2] sm:$0x1]
    %v99 = vperm.slane %v97, 0
    %v117 = vunpack.c.l.b16 %v65
    %v118 = vunpack.c.l.b16 %v66
    %v119 = vunpack.c.l.b16 %v67
    %v120 = vunpack.c.l.b16 %v68
    %v121 = vunpack.c.l.b16 %v69
    %v122 = vunpack.c.l.b16 %v70
    %v123 = vunpack.c.l.b16 %v71
    %v124 = vunpack.c.l.b16 %v72
    %v125 = vunpack.c.l.b16 %v73
    %v126 = vunpack.c.l.b16 %v74
    %v127 = vunpack.c.l.b16 %v75
    %v128 = vunpack.c.l.b16 %v76
    %v129 = vunpack.c.l.b16 %v77
    %v130 = vunpack.c.l.b16 %v78
    %v131 = vunpack.c.l.b16 %v79
    %v132 = vunpack.c.l.b16 %v80
    %v133 = vpack.c.b16 %v118, %v117
    %v134 = vpack.c.b16 %v120, %v119
    %v135 = vpack.c.b16 %v122, %v121
    %v136 = vpack.c.b16 %v124, %v123
    %v137 = vpack.c.b16 %v126, %v125
    %v138 = vpack.c.b16 %v128, %v127
    %v139 = vpack.c.b16 %v130, %v129
    %v140 = vpack.c.b16 %v132, %v131
    %v165 = vunpack.c.l.b16 %v81
    %v166 = vunpack.c.l.b16 %v82
    %v167 = vunpack.c.l.b16 %v83
    %v168 = vunpack.c.l.b16 %v84
    %v169 = vunpack.c.l.b16 %v85
    %v170 = vunpack.c.l.b16 %v86
    %v171 = vunpack.c.l.b16 %v87
    %v172 = vunpack.c.l.b16 %v88
    %v173 = vunpack.c.l.b16 %v89
    %v174 = vunpack.c.l.b16 %v90
    %v175 = vunpack.c.l.b16 %v91
    %v176 = vunpack.c.l.b16 %v92
    %v177 = vunpack.c.l.b16 %v93
    %v178 = vunpack.c.l.b16 %v94
    %v179 = vunpack.c.l.b16 %v95
    %v180 = vunpack.c.l.b16 %v96
    %v181 = vpack.c.b16 %v166, %v165
    %v182 = vpack.c.b16 %v168, %v167
    %v183 = vpack.c.b16 %v170, %v169
    %v184 = vpack.c.b16 %v172, %v171
    %v185 = vpack.c.b16 %v174, %v173
    %v186 = vpack.c.b16 %v176, %v175
    %v187 = vpack.c.b16 %v178, %v177
    %v188 = vpack.c.b16 %v180, %v179
    %197 = vmatpush.bf16.msra.mxu0 %v188
    %198 = vmatpush.bf16.msra.mxu0 %v187
    %199 = vmatpush.bf16.msra.mxu0 %v186
    %200 = vmatpush.bf16.msra.mxu0 %v185
    %201 = vmatpush.bf16.msra.mxu0 %v184
    %202 = vmatpush.bf16.msra.mxu0 %v183
    %203 = vmatpush.bf16.msra.mxu0 %v182
    %204 = vmatpush.bf16.msra.mxu0 %v181
    %205 = vmatmul.bf16.gmra.mxu0 %v133
    %v206 = vpop.f32.mrf.mxu0
    %v207 = vadd.f32 %v99, %v206
    %v208 = vpop.f32.mrf.mxu0
    %v209 = vadd.f32 %v99, %v208
    %210 = vmatmul.bf16.gmra.mxu0 %v134
    %v211 = vpop.f32.mrf.mxu0
    %v212 = vadd.f32 %v99, %v211
    %v213 = vpop.f32.mrf.mxu0
    %v214 = vadd.f32 %v99, %v213
    %215 = vmatmul.bf16.gmra.mxu0 %v135
    %v216 = vpop.f32.mrf.mxu0
    %v217 = vadd.f32 %v99, %v216
    %v218 = vpop.f32.mrf.mxu0
    %v219 = vadd.f32 %v99, %v218
    %220 = vmatmul.bf16.gmra.mxu0 %v136
    %v221 = vpop.f32.mrf.mxu0
    %v222 = vadd.f32 %v99, %v221
    %v223 = vpop.f32.mrf.mxu0
    %v224 = vadd.f32 %v99, %v223
    %225 = vmatmul.bf16.gmra.mxu0 %v137
    %v226 = vpop.f32.mrf.mxu0
    %v227 = vadd.f32 %v99, %v226
    %v228 = vpop.f32.mrf.mxu0
    %v229 = vadd.f32 %v99, %v228
    %230 = vmatmul.bf16.gmra.mxu0 %v138
    %v231 = vpop.f32.mrf.mxu0
    %v232 = vadd.f32 %v99, %v231
    %v233 = vpop.f32.mrf.mxu0
    %v234 = vadd.f32 %v99, %v233
    %235 = vmatmul.bf16.gmra.mxu0 %v139
    %v236 = vpop.f32.mrf.mxu0
    %v237 = vadd.f32 %v99, %v236
    %v238 = vpop.f32.mrf.mxu0
    %v239 = vadd.f32 %v99, %v238
    %240 = vmatmul.bf16.gmra.mxu0 %v140
    %v241 = vpop.f32.mrf.mxu0
    %v242 = vadd.f32 %v99, %v241
    %v243 = vpop.f32.mrf.mxu0
    %v244 = vadd.f32 %v99, %v243
    %245 = vdwg.mxu0
    %v246 = vmax.f32 %v207, 0.0
    %v247 = vmax.f32 %v209, 0.0
    %v248 = vmax.f32 %v212, 0.0
    %v249 = vmax.f32 %v214, 0.0
    %v250 = vmax.f32 %v217, 0.0
    %v251 = vmax.f32 %v219, 0.0
    %v252 = vmax.f32 %v222, 0.0
    %v253 = vmax.f32 %v224, 0.0
    %v254 = vmax.f32 %v227, 0.0
    %v255 = vmax.f32 %v229, 0.0
    %v256 = vmax.f32 %v232, 0.0
    %v257 = vmax.f32 %v234, 0.0
    %v258 = vmax.f32 %v237, 0.0
    %v259 = vmax.f32 %v239, 0.0
    %v260 = vmax.f32 %v242, 0.0
    %v261 = vmax.f32 %v244, 0.0
    %v262 = vpack.c.bf16 %v247, %v246
    %v263 = vpack.c.bf16 %v249, %v248
    %v264 = vpack.c.bf16 %v251, %v250
    %v265 = vpack.c.bf16 %v253, %v252
    %v266 = vpack.c.bf16 %v255, %v254
    %v267 = vpack.c.bf16 %v257, %v256
    %v268 = vpack.c.bf16 %v259, %v258
    %v269 = vpack.c.bf16 %v261, %v260
    %v270 = vld [vmem:[#allocation7] sm:$0xf]
    %v271 = vld [vmem:[#allocation7 + $0x4] sm:$0xf]
    %v272 = vld [vmem:[#allocation7 + $0x8] sm:$0xf]
    %v273 = vld [vmem:[#allocation7 + $0xc] sm:$0xf]
    %v274 = vld [vmem:[#allocation7 + $0x10] sm:$0xf]
    %v275 = vld [vmem:[#allocation7 + $0x14] sm:$0xf]
    %v276 = vld [vmem:[#allocation7 + $0x18] sm:$0xf]
    %v277 = vld [vmem:[#allocation7 + $0x1c] sm:$0xf]
    %v278 = vld [vmem:[#allocation7 + $0x20] sm:$0xf]
    %v279 = vld [vmem:[#allocation7 + $0x24] sm:$0xf]
    %v280 = vld [vmem:[#allocation7 + $0x28] sm:$0xf]
    %v281 = vld [vmem:[#allocation7 + $0x2c] sm:$0xf]
    %v282 = vld [vmem:[#allocation7 + $0x30] sm:$0xf]
    %v283 = vld [vmem:[#allocation7 + $0x34] sm:$0xf]
    %v284 = vld [vmem:[#allocation7 + $0x38] sm:$0xf]
    %v285 = vld [vmem:[#allocation7 + $0x3c] sm:$0xf]
    %v302 = vunpack.c.l.b16 %v270
    %v303 = vunpack.c.l.b16 %v271
    %v304 = vunpack.c.l.b16 %v272
    %v305 = vunpack.c.l.b16 %v273
    %v306 = vunpack.c.l.b16 %v274
    %v307 = vunpack.c.l.b16 %v275
    %v308 = vunpack.c.l.b16 %v276
    %v309 = vunpack.c.l.b16 %v277
    %v310 = vunpack.c.l.b16 %v278
    %v311 = vunpack.c.l.b16 %v279
    %v312 = vunpack.c.l.b16 %v280
    %v313 = vunpack.c.l.b16 %v281
    %v314 = vunpack.c.l.b16 %v282
    %v315 = vunpack.c.l.b16 %v283
    %v316 = vunpack.c.l.b16 %v284
    %v317 = vunpack.c.l.b16 %v285
    %v318 = vpack.c.b16 %v303, %v302
    %v319 = vpack.c.b16 %v305, %v304
    %v320 = vpack.c.b16 %v307, %v306
    %v321 = vpack.c.b16 %v309, %v308
    %v322 = vpack.c.b16 %v311, %v310
    %v323 = vpack.c.b16 %v313, %v312
    %v324 = vpack.c.b16 %v315, %v314
    %v325 = vpack.c.b16 %v317, %v316
    %334 = vmatpush.bf16.msra.mxu0 %v325
    %335 = vmatpush.bf16.msra.mxu0 %v324
    %336 = vmatpush.bf16.msra.mxu0 %v323
    %337 = vmatpush.bf16.msra.mxu0 %v322
    %338 = vmatpush.bf16.msra.mxu0 %v321
    %339 = vmatpush.bf16.msra.mxu0 %v320
    %340 = vmatpush.bf16.msra.mxu0 %v319
    %341 = vmatpush.bf16.msra.mxu0 %v318
    %342 = vmatmul.bf16.gmra.mxu0 %v262
    %v343 = vpop.f32.mrf.mxu0
    %v344 = vadd.f32 0.0, %v343
    %v345 = vpop.f32.mrf.mxu0
    %v346 = vadd.f32 0.0, %v345
    %347 = vmatmul.bf16.gmra.mxu0 %v263
    %v348 = vpop.f32.mrf.mxu0
    %v349 = vadd.f32 0.0, %v348
    %v350 = vpop.f32.mrf.mxu0
    %v351 = vadd.f32 0.0, %v350
    %352 = vmatmul.bf16.gmra.mxu0 %v264
    %v353 = vpop.f32.mrf.mxu0
    %v354 = vadd.f32 0.0, %v353
    %v355 = vpop.f32.mrf.mxu0
    %v356 = vadd.f32 0.0, %v355
    %357 = vmatmul.bf16.gmra.mxu0 %v265
    %v358 = vpop.f32.mrf.mxu0
    %v359 = vadd.f32 0.0, %v358
    %v360 = vpop.f32.mrf.mxu0
    %v361 = vadd.f32 0.0, %v360
    %362 = vmatmul.bf16.gmra.mxu0 %v266
    %v363 = vpop.f32.mrf.mxu0
    %v364 = vadd.f32 0.0, %v363
    %v365 = vpop.f32.mrf.mxu0
    %v366 = vadd.f32 0.0, %v365
    %367 = vmatmul.bf16.gmra.mxu0 %v267
    %v368 = vpop.f32.mrf.mxu0
    %v369 = vadd.f32 0.0, %v368
    %v370 = vpop.f32.mrf.mxu0
    %v371 = vadd.f32 0.0, %v370
    %372 = vmatmul.bf16.gmra.mxu0 %v268
    %v373 = vpop.f32.mrf.mxu0
    %v374 = vadd.f32 0.0, %v373
    %v375 = vpop.f32.mrf.mxu0
    %v376 = vadd.f32 0.0, %v375
    %377 = vmatmul.bf16.gmra.mxu0 %v269
    %v378 = vpop.f32.mrf.mxu0
    %v379 = vadd.f32 0.0, %v378
    %v380 = vpop.f32.mrf.mxu0
    %v381 = vadd.f32 0.0, %v380
    %382 = vdwg.mxu0
    %v383 = vpack.c.bf16 %v344, %v344
    %v384 = vpack.c.bf16 %v346, %v346
    %v385 = vpack.c.bf16 %v349, %v349
    %v386 = vpack.c.bf16 %v351, %v351
    %v387 = vpack.c.bf16 %v354, %v354
    %v388 = vpack.c.bf16 %v356, %v356
    %v389 = vpack.c.bf16 %v359, %v359
    %v390 = vpack.c.bf16 %v361, %v361
    %v391 = vpack.c.bf16 %v364, %v364
    %v392 = vpack.c.bf16 %v366, %v366
    %v393 = vpack.c.bf16 %v369, %v369
    %v394 = vpack.c.bf16 %v371, %v371
    %v395 = vpack.c.bf16 %v374, %v374
    %v396 = vpack.c.bf16 %v376, %v376
    %v397 = vpack.c.bf16 %v379, %v379
    %v398 = vpack.c.bf16 %v381, %v381
    %399 = vst [vmem:[#allocation8] sm:$0xf] %v383
    %400 = vst [vmem:[#allocation8 + $0x4] sm:$0xf] %v384
    %401 = vst [vmem:[#allocation8 + $0x8] sm:$0xf] %v385
    %402 = vst [vmem:[#allocation8 + $0xc] sm:$0xf] %v386
    %403 = vst [vmem:[#allocation8 + $0x10] sm:$0xf] %v387
    %404 = vst [vmem:[#allocation8 + $0x14] sm:$0xf] %v388
    %405 = vst [vmem:[#allocation8 + $0x18] sm:$0xf] %v389
    %406 = vst [vmem:[#allocation8 + $0x1c] sm:$0xf] %v390
    %407 = vst [vmem:[#allocation8 + $0x20] sm:$0xf] %v391
    %408 = vst [vmem:[#allocation8 + $0x24] sm:$0xf] %v392
    %409 = vst [vmem:[#allocation8 + $0x28] sm:$0xf] %v393
    %410 = vst [vmem:[#allocation8 + $0x2c] sm:$0xf] %v394
    %411 = vst [vmem:[#allocation8 + $0x30] sm:$0xf] %v395
    %412 = vst [vmem:[#allocation8 + $0x34] sm:$0xf] %v396
    %413 = vst [vmem:[#allocation8 + $0x38] sm:$0xf] %v397
    %414 = vst [vmem:[#allocation8 + $0x3c] sm:$0xf] %v398
    // Predicated region
    $region30: #{tpu_custom_call.1} parent=1 // pred_check
      _
    $region31: #{tpu_custom_call.1} parent=1 // pred_check_branch
      %416 = sbr.rel (0) target = $region33
    $region32: #{tpu_custom_call.1} parent=1 // pred_region
      %418 = vsyncadd [#allocation4], 0
      %s419 = sshll.u32 [#allocation8], 4
      %s420 = int_to_ptr.vmem [resolvable:$true] %s419
      %s421 = sshll.u32 %s4, 4
      %s422 = int_to_ptr.hbm [resolvable:$true] %s421
      %427 = dma.vmem_to_hbm [thread:$0]  %s420, 1024, %s422, [#allocation4], 64, 64, 4
    $region33: #{tpu_custom_call.1} parent=1 // pred_fallthru
      _
    // Predicated region
    $region34: #{tpu_custom_call.1} parent=1 // pred_check
      _
    $region35: #{tpu_custom_call.1} parent=1 // pred_check_branch
      %429 = sbr.rel (0) target = $region37
    $region36: #{tpu_custom_call.1} parent=1 // pred_region
      %431 = dma.done [#allocation4], 1024
    $region37: #{tpu_custom_call.1} parent=1 // pred_fallthru
      _
    %432 = vsyncpa [#allocation3], 1
    %433 = vsyncpa [#allocation6], 1
    %434 = vsyncpa [#allocation4], 1

</llo_original>
